<compile_context>
chip_gen: v7x
topology: tpu7x:2x2x1
jax: 0.10.0
libtpu: 0.0.40
codegen_flags: <defaults>
</compile_context>

<pallas_src>
import jax
import jax.numpy as jnp
from jax.experimental import pallas as pl
from jax.experimental.pallas import tpu as pltpu


# ----------------------------- Pallas kernel --------------------------------

def _linear_kernel(x_ref, w_ref, b_ref, o_ref):
    # x_ref: (TM, K) bf16   w_ref: (K, N) bf16   b_ref: (1, N) f32   o_ref: (TM, N) f32
    acc = jnp.dot(x_ref[...], w_ref[...], preferred_element_type=jnp.float32)
    o_ref[...] = (acc + b_ref[...]).astype(o_ref.dtype)


def _round_up(x, m):
    return ((x + m - 1) // m) * m


def _select_row_tile(n_rows, desired_tm):
    """Row tile for the token matmul.

    Small problems (n_rows <= desired_tm): one grid step covering everything,
    rounded up to a sublane multiple — per-step pipeline overhead (~0.35 us)
    would dominate if we split a memory-bound tile this tiny.

    Large problems: big fixed tiles (desired_tm); the resulting multi-step
    grid axis is marked "parallel" so both v7x TensorCores get sharded work.
    """
    if n_rows <= desired_tm:
        return max(8, _round_up(n_rows, 8))
    return desired_tm


def pallas_linear(x_flat, weight_t, bias, *, desired_tm=1024,
                  out_dtype=jnp.float32):
    """Per-token linear:  (N, K) @ (K, C_out) + bias  ->  (N, C_out).

    Activations / weights are streamed as bf16 (halves HBM traffic on this
    bandwidth-bound problem); accumulation and the bias add stay in f32.
    Ragged row counts are padded to the tile size and sliced off afterwards.
    """
    n_rows, k = x_flat.shape
    c_out = weight_t.shape[1]

    tm = _select_row_tile(n_rows, desired_tm)
    n_pad = _round_up(n_rows, tm)
    if n_pad != n_rows:
        x_flat = jnp.pad(x_flat, ((0, n_pad - n_rows), (0, 0)))

    x_bf16 = x_flat.astype(jnp.bfloat16)
    w_bf16 = weight_t.astype(jnp.bfloat16)
    bias2d = bias.reshape(1, c_out).astype(jnp.float32)

    out = pl.pallas_call(
        _linear_kernel,
        out_shape=jax.ShapeDtypeStruct((n_pad, c_out), out_dtype),
        grid_spec=pltpu.PrefetchScalarGridSpec(
            num_scalar_prefetch=0,
            grid=(n_pad // tm,),
            in_specs=[
                pl.BlockSpec((tm, k), lambda i: (i, 0)),      # streamed activation tile
                pl.BlockSpec((k, c_out), lambda i: (0, 0)),   # resident weight (64 KiB bf16)
                pl.BlockSpec((1, c_out), lambda i: (0, 0)),   # resident bias
            ],
            out_specs=pl.BlockSpec((tm, c_out), lambda i: (i, 0)),
        ),
        compiler_params=pltpu.CompilerParams(
            dimension_semantics=("parallel",)),
    )(x_bf16, w_bf16, bias2d)

    return out[:n_rows] if n_pad != n_rows else out


# --------------------------- module-level wrappers ---------------------------

def prepare_merge_weight(w_pt, c_in, downscaling_factor=2):
    """PyTorch linear.weight is (C_out, c_in*f*f) with input index
    c*f*f + kh*f + kw (nn.Unfold channel ordering).  The kernel consumes
    tokens built as (kh, kw, c) — a single cheap transpose of the NCHW input —
    so the Unfold ordering is folded into the weight here, once."""
    f = downscaling_factor
    c_out = w_pt.shape[0]
    w = w_pt.reshape(c_out, c_in, f, f)            # (o, c, kh, kw)
    w = jnp.transpose(w, (2, 3, 1, 0))             # (kh, kw, c, o)
    return w.reshape(f * f * c_in, c_out)          # (K, C_out)


def patch_merging(x, weight_t, bias, downscaling_factor=2, desired_tm=1024):
    """PatchMerging.forward.  x: (b, c, h, w) NCHW -> (b, c_out, h/f, w/f)."""
    b, c, h, w = x.shape
    f = downscaling_factor
    nh, nw = h // f, w // f

    # Patch gather (glue, plain JAX): one transpose; tokens laid out (kh, kw, c)
    # which matches the column permutation baked into `weight_t`.  XLA fuses
    # the bf16 cast inside pallas_linear with this relayout.
    y = x.reshape(b, c, nh, f, nw, f)
    y = jnp.transpose(y, (0, 2, 4, 3, 5, 1))       # (b, nh, nw, kh, kw, c)
    tokens = y.reshape(b * nh * nw, f * f * c)

    out_flat = pallas_linear(tokens, weight_t, bias, desired_tm=desired_tm)

    c_out = weight_t.shape[1]
    out = out_flat.reshape(b, nh, nw, c_out)
    # NOTE: if the downstream consumer accepted NHWC this transpose could be
    # dropped; it is kept so the output matches the PyTorch module (NCHW).
    return jnp.transpose(out, (0, 3, 1, 2))


def down2_forward(inputs, params):
    """Down2.forward.  inputs: (b, 64, h, w) -> (b, 128, h/2, w/2)."""
    emb = patch_merging(inputs, params["embed_w_t"], params["embed_b"])
    # TODO(synk): FoatAttention(128, size) is referenced by Down2 but its
    # definition was not provided in the source; nn1/nn2 are identity here.
    scale2_1 = emb
    scale2_2 = scale2_1
    return scale2_2


def init_params(key, c_in=64, c_out=128, downscaling_factor=2):
    """Deterministic params for PatchMerging(64, 128): Linear(256, 128),
    stored in PyTorch layout and pre-permuted once for the kernel."""
    k_w, k_b = jax.random.split(key)
    in_f = c_in * downscaling_factor ** 2
    bound = 1.0 / jnp.sqrt(in_f)
    w_pt = jax.random.uniform(k_w, (c_out, in_f), jnp.float32, -bound, bound)
    b = jax.random.uniform(k_b, (c_out,), jnp.float32, -bound, bound)
    return {
        "embed_w_pt": w_pt,                                           # torch (out, in)
        "embed_w_t": prepare_merge_weight(w_pt, c_in, downscaling_factor),
        "embed_b": b,
    }


if __name__ == "__main__":
    key = jax.random.PRNGKey(0)
    k_params, k_x = jax.random.split(key)

    params = init_params(k_params)

    # Down2 expects 64 input channels (PatchMerging(64, 128)).
    b, c, h, w = 2, 64, 16, 16
    x = jax.random.normal(k_x, (b, c, h, w), jnp.float32)

    out = jax.jit(down2_forward)(x, params)
    out = jax.block_until_ready(out)

    assert out.shape == (b, 128, h // 2, w // 2), out.shape
    assert out.dtype == jnp.float32

    # Sanity check against a plain-JAX reference that follows the PyTorch
    # module exactly (nn.Unfold channel order + Linear on the original weight).
    f = 2
    nh, nw = h // f, w // f
    xr = x.reshape(b, c, nh, f, nw, f)
    unf = jnp.transpose(xr, (0, 1, 3, 5, 2, 4)).reshape(b, c * f * f, nh, nw)
    tok = jnp.transpose(unf, (0, 2, 3, 1))                     # (b, nh, nw, 256)
    ref = tok @ params["embed_w_pt"].T + params["embed_b"]
    ref = jnp.transpose(ref, (0, 3, 1, 2))                     # NCHW
    # bf16 activations / weights (f32 accumulation) -> loosened tolerance.
    assert jnp.allclose(out, ref, atol=5e-2, rtol=5e-2), float(
        jnp.max(jnp.abs(out - ref)))

    print("KERNEL_OK")
</pallas_src>

<mosaic_0001>
module attributes {stable_mosaic.version = 11 : i64} {
  func.func @_linear_kernel(%arg0: i32, %arg1: memref<128x256xbf16, #tpu.memory_space<vmem>>, %arg2: memref<256x128xbf16, #tpu.memory_space<vmem>>, %arg3: memref<1x128xf32, #tpu.memory_space<vmem>>, %arg4: memref<128x128xf32, #tpu.memory_space<vmem>>) attributes {dimension_semantics = [#tpu.dimension_semantics<parallel>], iteration_bounds = array<i64: 1>, scalar_prefetch = 0 : i64, scratch_operands = 0 : i64, tpu.core_type = #tpu.core_type<tc>, window_params = [{transform_indices = @transform_0, window_bounds = array<i64: 128, 256>}, {pipeline_mode = #tpu.pipeline_mode<synchronous>, transform_indices = @transform_1, window_bounds = array<i64: 256, 128>}, {pipeline_mode = #tpu.pipeline_mode<synchronous>, transform_indices = @transform_2, window_bounds = array<i64: 1, 128>}, {transform_indices = @transform_3, window_bounds = array<i64: 128, 128>}]} {
    %c0 = arith.constant 0 : index
    %c0_0 = arith.constant 0 : index
    %0 = vector.load %arg1[%c0, %c0_0] : memref<128x256xbf16, #tpu.memory_space<vmem>>, vector<128x256xbf16>
    %c0_1 = arith.constant 0 : index
    %c0_2 = arith.constant 0 : index
    %1 = vector.load %arg2[%c0_1, %c0_2] : memref<256x128xbf16, #tpu.memory_space<vmem>>, vector<256x128xbf16>
    %cst = arith.constant dense<0.000000e+00> : vector<128x128xf32>
    %2 = tpu.matmul %0, %1, %cst {dimension_numbers = #tpu.dot_dimension_numbers<[1], [0], [0], [1], [0, 0, 1, 1], [], []>} : vector<128x256xbf16>, vector<256x128xbf16>, vector<128x128xf32> -> vector<128x128xf32>
    %c0_3 = arith.constant 0 : index
    %c0_4 = arith.constant 0 : index
    %3 = vector.load %arg3[%c0_3, %c0_4] : memref<1x128xf32, #tpu.memory_space<vmem>>, vector<1x128xf32>
    %4 = vector.broadcast %3 : vector<1x128xf32> to vector<128x128xf32>
    %5 = arith.addf %2, %4 : vector<128x128xf32>
    %c0_5 = arith.constant 0 : index
    %c0_6 = arith.constant 0 : index
    %6 = vector.load %arg4[%c0_5, %c0_6] : memref<128x128xf32, #tpu.memory_space<vmem>>, vector<128x128xf32>
    tpu.vector_store %arg4[%c0_5, %c0_6], %5 {strides = array<i32>} : memref<128x128xf32, #tpu.memory_space<vmem>>, vector<128x128xf32>,
    return
  }
  func.func @transform_0(%arg0: i32) -> (i32, i32) {
    %c0_i32 = arith.constant 0 : i32
    %c0_i32_0 = arith.constant 0 : i32
    return %arg0, %c0_i32 : i32, i32
  }
  func.func @transform_1(%arg0: i32) -> (i32, i32) {
    %c0_i32 = arith.constant 0 : i32
    %c0_i32_0 = arith.constant 0 : i32
    %c0_i32_1 = arith.constant 0 : i32
    return %c0_i32, %c0_i32_0 : i32, i32
  }
  func.func @transform_2(%arg0: i32) -> (i32, i32) {
    %c0_i32 = arith.constant 0 : i32
    %c0_i32_0 = arith.constant 0 : i32
    %c0_i32_1 = arith.constant 0 : i32
    return %c0_i32, %c0_i32_0 : i32, i32
  }
  func.func @transform_3(%arg0: i32) -> (i32, i32) {
    %c0_i32 = arith.constant 0 : i32
    %c0_i32_0 = arith.constant 0 : i32
    return %arg0, %c0_i32 : i32, i32
  }
}

</mosaic_0001>

<llo_original>
// kernel: down2_forward.1
$region0: #{down2_forward.1}
  #allocation0 [shape = 'u32[]', space=smem, size = 0x4, offset = 0x4, fixed_abs, tag = 'smem constant byte address 0x4 - core index']
  #allocation1 [shape = 'u32[144,128]{1,0:T(1,128)}', space=vmem, size = 0x12000, scoped, tag = 'internal scratch']
  %s0 = inlined_call_operand.vmem [shape: bf16[128,256], index: 0, kind: input, shape index: {}]
  %s1 = inlined_call_operand.vmem [shape: bf16[256,128], index: 1, kind: input, shape index: {}]
  %s2 = inlined_call_operand.vmem [shape: f32[1,128], index: 2, kind: input, shape index: {}]
  %s3 = inlined_call_operand.hbm [shape: f32[128,128], index: 3, kind: output, shape index: {}]
  %s4 = sld [smem:[#allocation0]]
  $region22: #{down2_forward.1} parent=0
    _
  %s6 = ssub.s32 1, %s4
  %s7 = scalar_select 0, %s6, %s4
  $region1: #{down2_forward.1} parent=0
    #allocation2 [shape = 'u8[65536]{0}', space=vmem, size = 0x10000, scoped, tag = 'output window, operand 0, single buffered']
    #allocation3 [shape = 's32[1]{0}', space=sflag, size = 0x4, scoped, tag = 'scoped memory for down2_forward.1']
    %8 = vsyncpa [#allocation3], 0
    // Predicated region
    $region2: #{down2_forward.1} parent=1 // pred_check
      _
    $region3: #{down2_forward.1} parent=1 // pred_check_branch
      %10 = sbr.rel (0) target = $region5
    $region4: #{down2_forward.1} parent=1 // pred_region
      _
    $region5: #{down2_forward.1} parent=1 // pred_fallthru
      _
    // Predicated region
    $region6: #{down2_forward.1} parent=1 // pred_check
      _
    $region7: #{down2_forward.1} parent=1 // pred_check_branch
      %12 = sbr.rel (0) target = $region9
    $region8: #{down2_forward.1} parent=1 // pred_region
      _
    $region9: #{down2_forward.1} parent=1 // pred_fallthru
      _
    // Predicated region
    $region10: #{down2_forward.1} parent=1 // pred_check
      _
    $region11: #{down2_forward.1} parent=1 // pred_check_branch
      %14 = sbr.rel (0) target = $region13
    $region12: #{down2_forward.1} parent=1 // pred_region
      _
    $region13: #{down2_forward.1} parent=1 // pred_fallthru
      _
    %v16 = vld [vmem:[%s0] sm:$0xff]
    %v17 = vld [vmem:[%s0 + $0x8] sm:$0xff]
    %v18 = vld [vmem:[%s0 + $0x10] sm:$0xff]
    %v19 = vld [vmem:[%s0 + $0x18] sm:$0xff]
    %v20 = vld [vmem:[%s0 + $0x20] sm:$0xff]
    %v21 = vld [vmem:[%s0 + $0x28] sm:$0xff]
    %v22 = vld [vmem:[%s0 + $0x30] sm:$0xff]
    %v23 = vld [vmem:[%s0 + $0x38] sm:$0xff]
    %v24 = vld [vmem:[%s0 + $0x40] sm:$0xff]
    %v25 = vld [vmem:[%s0 + $0x48] sm:$0xff]
    %v26 = vld [vmem:[%s0 + $0x50] sm:$0xff]
    %v27 = vld [vmem:[%s0 + $0x58] sm:$0xff]
    %v28 = vld [vmem:[%s0 + $0x60] sm:$0xff]
    %v29 = vld [vmem:[%s0 + $0x68] sm:$0xff]
    %v30 = vld [vmem:[%s0 + $0x70] sm:$0xff]
    %v31 = vld [vmem:[%s0 + $0x78] sm:$0xff]
    %v32 = vld [vmem:[%s1] sm:$0xf]
    %v33 = vld [vmem:[%s1 + $0x4] sm:$0xf]
    %v34 = vld [vmem:[%s1 + $0x8] sm:$0xf]
    %v35 = vld [vmem:[%s1 + $0xc] sm:$0xf]
    %v36 = vld [vmem:[%s1 + $0x10] sm:$0xf]
    %v37 = vld [vmem:[%s1 + $0x14] sm:$0xf]
    %v38 = vld [vmem:[%s1 + $0x18] sm:$0xf]
    %v39 = vld [vmem:[%s1 + $0x1c] sm:$0xf]
    %v40 = vld [vmem:[%s1 + $0x20] sm:$0xf]
    %v41 = vld [vmem:[%s1 + $0x24] sm:$0xf]
    %v42 = vld [vmem:[%s1 + $0x28] sm:$0xf]
    %v43 = vld [vmem:[%s1 + $0x2c] sm:$0xf]
    %v44 = vld [vmem:[%s1 + $0x30] sm:$0xf]
    %v45 = vld [vmem:[%s1 + $0x34] sm:$0xf]
    %v46 = vld [vmem:[%s1 + $0x38] sm:$0xf]
    %v47 = vld [vmem:[%s1 + $0x3c] sm:$0xf]
    %v48 = vld [vmem:[%s1 + $0x40] sm:$0xf]
    %v49 = vld [vmem:[%s1 + $0x44] sm:$0xf]
    %v50 = vld [vmem:[%s1 + $0x48] sm:$0xf]
    %v51 = vld [vmem:[%s1 + $0x4c] sm:$0xf]
    %v52 = vld [vmem:[%s1 + $0x50] sm:$0xf]
    %v53 = vld [vmem:[%s1 + $0x54] sm:$0xf]
    %v54 = vld [vmem:[%s1 + $0x58] sm:$0xf]
    %v55 = vld [vmem:[%s1 + $0x5c] sm:$0xf]
    %v56 = vld [vmem:[%s1 + $0x60] sm:$0xf]
    %v57 = vld [vmem:[%s1 + $0x64] sm:$0xf]
    %v58 = vld [vmem:[%s1 + $0x68] sm:$0xf]
    %v59 = vld [vmem:[%s1 + $0x6c] sm:$0xf]
    %v60 = vld [vmem:[%s1 + $0x70] sm:$0xf]
    %v61 = vld [vmem:[%s1 + $0x74] sm:$0xf]
    %v62 = vld [vmem:[%s1 + $0x78] sm:$0xf]
    %v63 = vld [vmem:[%s1 + $0x7c] sm:$0xf]
    %v64 = vld [vmem:[%s2] sm:$0x1]
    %v66 = vlaneseq
    %v67 = vshrl.u32 %v66, 7
    %v68 = vsub.s32 0, %v67
    %v69 = vrot.slane %v64, %v68
    %v87 = vunpack.c.l.b16 %v16
    %v88 = vunpack.c.h.b16 %v16
    %v89 = vunpack.c.l.b16 %v17
    %v90 = vunpack.c.h.b16 %v17
    %v91 = vunpack.c.l.b16 %v18
    %v92 = vunpack.c.h.b16 %v18
    %v93 = vunpack.c.l.b16 %v19
    %v94 = vunpack.c.h.b16 %v19
    %v95 = vunpack.c.l.b16 %v20
    %v96 = vunpack.c.h.b16 %v20
    %v97 = vunpack.c.l.b16 %v21
    %v98 = vunpack.c.h.b16 %v21
    %v99 = vunpack.c.l.b16 %v22
    %v100 = vunpack.c.h.b16 %v22
    %v101 = vunpack.c.l.b16 %v23
    %v102 = vunpack.c.h.b16 %v23
    %v103 = vunpack.c.l.b16 %v24
    %v104 = vunpack.c.h.b16 %v24
    %v105 = vunpack.c.l.b16 %v25
    %v106 = vunpack.c.h.b16 %v25
    %v107 = vunpack.c.l.b16 %v26
    %v108 = vunpack.c.h.b16 %v26
    %v109 = vunpack.c.l.b16 %v27
    %v110 = vunpack.c.h.b16 %v27
    %v111 = vunpack.c.l.b16 %v28
    %v112 = vunpack.c.h.b16 %v28
    %v113 = vunpack.c.l.b16 %v29
    %v114 = vunpack.c.h.b16 %v29
    %v115 = vunpack.c.l.b16 %v30
    %v116 = vunpack.c.h.b16 %v30
    %v117 = vunpack.c.l.b16 %v31
    %v118 = vunpack.c.h.b16 %v31
    %v119 = vpack.c.b16 %v89, %v87
    %v120 = vpack.c.b16 %v90, %v88
    %v121 = vpack.c.b16 %v93, %v91
    %v122 = vpack.c.b16 %v94, %v92
    %v123 = vpack.c.b16 %v97, %v95
    %v124 = vpack.c.b16 %v98, %v96
    %v125 = vpack.c.b16 %v101, %v99
    %v126 = vpack.c.b16 %v102, %v100
    %v127 = vpack.c.b16 %v105, %v103
    %v128 = vpack.c.b16 %v106, %v104
    %v129 = vpack.c.b16 %v109, %v107
    %v130 = vpack.c.b16 %v110, %v108
    %v131 = vpack.c.b16 %v113, %v111
    %v132 = vpack.c.b16 %v114, %v112
    %v133 = vpack.c.b16 %v117, %v115
    %v134 = vpack.c.b16 %v118, %v116
    %v183 = vunpack.c.l.b16 %v32
    %v184 = vunpack.c.l.b16 %v33
    %v185 = vunpack.c.l.b16 %v34
    %v186 = vunpack.c.l.b16 %v35
    %v187 = vunpack.c.l.b16 %v36
    %v188 = vunpack.c.l.b16 %v37
    %v189 = vunpack.c.l.b16 %v38
    %v190 = vunpack.c.l.b16 %v39
    %v191 = vunpack.c.l.b16 %v40
    %v192 = vunpack.c.l.b16 %v41
    %v193 = vunpack.c.l.b16 %v42
    %v194 = vunpack.c.l.b16 %v43
    %v195 = vunpack.c.l.b16 %v44
    %v196 = vunpack.c.l.b16 %v45
    %v197 = vunpack.c.l.b16 %v46
    %v198 = vunpack.c.l.b16 %v47
    %v199 = vunpack.c.l.b16 %v48
    %v200 = vunpack.c.l.b16 %v49
    %v201 = vunpack.c.l.b16 %v50
    %v202 = vunpack.c.l.b16 %v51
    %v203 = vunpack.c.l.b16 %v52
    %v204 = vunpack.c.l.b16 %v53
    %v205 = vunpack.c.l.b16 %v54
    %v206 = vunpack.c.l.b16 %v55
    %v207 = vunpack.c.l.b16 %v56
    %v208 = vunpack.c.l.b16 %v57
    %v209 = vunpack.c.l.b16 %v58
    %v210 = vunpack.c.l.b16 %v59
    %v211 = vunpack.c.l.b16 %v60
    %v212 = vunpack.c.l.b16 %v61
    %v213 = vunpack.c.l.b16 %v62
    %v214 = vunpack.c.l.b16 %v63
    %v215 = vpack.c.b16 %v184, %v183
    %v216 = vpack.c.b16 %v186, %v185
    %v217 = vpack.c.b16 %v188, %v187
    %v218 = vpack.c.b16 %v190, %v189
    %v219 = vpack.c.b16 %v192, %v191
    %v220 = vpack.c.b16 %v194, %v193
    %v221 = vpack.c.b16 %v196, %v195
    %v222 = vpack.c.b16 %v198, %v197
    %v223 = vpack.c.b16 %v200, %v199
    %v224 = vpack.c.b16 %v202, %v201
    %v225 = vpack.c.b16 %v204, %v203
    %v226 = vpack.c.b16 %v206, %v205
    %v227 = vpack.c.b16 %v208, %v207
    %v228 = vpack.c.b16 %v210, %v209
    %v229 = vpack.c.b16 %v212, %v211
    %v230 = vpack.c.b16 %v214, %v213
    %247 = vmatprep.subr.bf16.mxu0 0
    %248 = vmatpush1.bf16.msra.mxu0 %v215
    %249 = vmatprep.subr.bf16.mxu0 0
    %250 = vmatpush1.bf16.msra.mxu0 %v216
    %251 = vmatprep.subr.bf16.mxu0 0
    %252 = vmatpush1.bf16.msra.mxu0 %v217
    %253 = vmatprep.subr.bf16.mxu0 0
    %254 = vmatpush1.bf16.msra.mxu0 %v218
    %255 = vmatprep.subr.bf16.mxu0 0
    %256 = vmatpush1.bf16.msra.mxu0 %v219
    %257 = vmatprep.subr.bf16.mxu0 0
    %258 = vmatpush1.bf16.msra.mxu0 %v220
    %259 = vmatprep.subr.bf16.mxu0 0
    %260 = vmatpush1.bf16.msra.mxu0 %v221
    %261 = vmatprep.subr.bf16.mxu0 0
    %262 = vmatpush1.bf16.msra.mxu0 %v222
    %263 = vmatprep.subr.bf16.mxu0 0
    %264 = vmatpush1.bf16.msra.mxu0 %v223
    %265 = vmatprep.subr.bf16.mxu0 0
    %266 = vmatpush1.bf16.msra.mxu0 %v224
    %267 = vmatprep.subr.bf16.mxu0 0
    %268 = vmatpush1.bf16.msra.mxu0 %v225
    %269 = vmatprep.subr.bf16.mxu0 0
    %270 = vmatpush1.bf16.msra.mxu0 %v226
    %271 = vmatprep.subr.bf16.mxu0 0
    %272 = vmatpush1.bf16.msra.mxu0 %v227
    %273 = vmatprep.subr.bf16.mxu0 0
    %274 = vmatpush1.bf16.msra.mxu0 %v228
    %275 = vmatprep.subr.bf16.mxu0 0
    %276 = vmatpush1.bf16.msra.mxu0 %v229
    %277 = vmatprep.subr.bf16.mxu0 0
    %278 = vmatpush1.bf16.msra.mxu0 %v230
    %279 = vmatprep.mubr.bf16.mxu0 %v120
    %280 = vmatmul.mubr.bf16.gmra.mrb[0].mxu0 %v119
    %v281 = vpop.f32.mrb[0].mxu0
    %v282 = vadd.f32 %v69, %v281
    %v283 = vpop.f32.mrb[0].mxu0
    %v284 = vpop.f32.mrb[0].mxu0
    %v285 = vadd.f32 %v69, %v284
    %v286 = vpop.f32.mrb[0].mxu0
    %287 = vmatprep.mubr.bf16.mxu0 %v122
    %288 = vmatmul.mubr.bf16.gmra.mrb[0].mxu0 %v121
    %v289 = vpop.f32.mrb[0].mxu0
    %v290 = vadd.f32 %v69, %v289
    %v291 = vpop.f32.mrb[0].mxu0
    %v292 = vpop.f32.mrb[0].mxu0
    %v293 = vadd.f32 %v69, %v292
    %v294 = vpop.f32.mrb[0].mxu0
    %295 = vmatprep.mubr.bf16.mxu0 %v124
    %296 = vmatmul.mubr.bf16.gmra.mrb[0].mxu0 %v123
    %v297 = vpop.f32.mrb[0].mxu0
    %v298 = vadd.f32 %v69, %v297
    %v299 = vpop.f32.mrb[0].mxu0
    %v300 = vpop.f32.mrb[0].mxu0
    %v301 = vadd.f32 %v69, %v300
    %v302 = vpop.f32.mrb[0].mxu0
    %303 = vmatprep.mubr.bf16.mxu0 %v126
    %304 = vmatmul.mubr.bf16.gmra.mrb[0].mxu0 %v125
    %v305 = vpop.f32.mrb[0].mxu0
    %v306 = vadd.f32 %v69, %v305
    %v307 = vpop.f32.mrb[0].mxu0
    %v308 = vpop.f32.mrb[0].mxu0
    %v309 = vadd.f32 %v69, %v308
    %v310 = vpop.f32.mrb[0].mxu0
    %311 = vmatprep.mubr.bf16.mxu0 %v128
    %312 = vmatmul.mubr.bf16.gmra.mrb[0].mxu0 %v127
    %v313 = vpop.f32.mrb[0].mxu0
    %v314 = vadd.f32 %v69, %v313
    %v315 = vpop.f32.mrb[0].mxu0
    %v316 = vpop.f32.mrb[0].mxu0
    %v317 = vadd.f32 %v69, %v316
    %v318 = vpop.f32.mrb[0].mxu0
    %319 = vmatprep.mubr.bf16.mxu0 %v130
    %320 = vmatmul.mubr.bf16.gmra.mrb[0].mxu0 %v129
    %v321 = vpop.f32.mrb[0].mxu0
    %v322 = vadd.f32 %v69, %v321
    %v323 = vpop.f32.mrb[0].mxu0
    %v324 = vpop.f32.mrb[0].mxu0
    %v325 = vadd.f32 %v69, %v324
    %v326 = vpop.f32.mrb[0].mxu0
    %327 = vmatprep.mubr.bf16.mxu0 %v132
    %328 = vmatmul.mubr.bf16.gmra.mrb[0].mxu0 %v131
    %v329 = vpop.f32.mrb[0].mxu0
    %v330 = vadd.f32 %v69, %v329
    %v331 = vpop.f32.mrb[0].mxu0
    %v332 = vpop.f32.mrb[0].mxu0
    %v333 = vadd.f32 %v69, %v332
    %v334 = vpop.f32.mrb[0].mxu0
    %335 = vmatprep.mubr.bf16.mxu0 %v134
    %336 = vmatmul.mubr.bf16.gmra.mrb[0].mxu0 %v133
    %v337 = vpop.f32.mrb[0].mxu0
    %v338 = vadd.f32 %v69, %v337
    %v339 = vpop.f32.mrb[0].mxu0
    %v340 = vpop.f32.mrb[0].mxu0
    %v341 = vadd.f32 %v69, %v340
    %v342 = vpop.f32.mrb[0].mxu0
    %343 = vdwg.mxu0
    %344 = vst [vmem:[#allocation2] sm:$0xff] %v282
    %345 = vst [vmem:[#allocation2 + $0x8] sm:$0xff] %v285
    %346 = vst [vmem:[#allocation2 + $0x10] sm:$0xff] %v290
    %347 = vst [vmem:[#allocation2 + $0x18] sm:$0xff] %v293
    %348 = vst [vmem:[#allocation2 + $0x20] sm:$0xff] %v298
    %349 = vst [vmem:[#allocation2 + $0x28] sm:$0xff] %v301
    %350 = vst [vmem:[#allocation2 + $0x30] sm:$0xff] %v306
    %351 = vst [vmem:[#allocation2 + $0x38] sm:$0xff] %v309
    %352 = vst [vmem:[#allocation2 + $0x40] sm:$0xff] %v314
    %353 = vst [vmem:[#allocation2 + $0x48] sm:$0xff] %v317
    %354 = vst [vmem:[#allocation2 + $0x50] sm:$0xff] %v322
    %355 = vst [vmem:[#allocation2 + $0x58] sm:$0xff] %v325
    %356 = vst [vmem:[#allocation2 + $0x60] sm:$0xff] %v330
    %357 = vst [vmem:[#allocation2 + $0x68] sm:$0xff] %v333
    %358 = vst [vmem:[#allocation2 + $0x70] sm:$0xff] %v338
    %359 = vst [vmem:[#allocation2 + $0x78] sm:$0xff] %v341
    // Predicated region
    $region14: #{down2_forward.1} parent=1 // pred_check
      _
    $region15: #{down2_forward.1} parent=1 // pred_check_branch
      %361 = sbr.rel (0) target = $region17
    $region16: #{down2_forward.1} parent=1 // pred_region
      %s363 = ssub.s32 2048, 2048
      %364 = vsyncadd [#allocation3], %s363
      %s365 = sshll.u32 [#allocation2], 4
      %s366 = int_to_ptr.vmem [resolvable:$true] %s365
      %371 = dma.vmem_to_hbm [thread:$0]  %s366, 2048, %s3, [#allocation3], 128, 128, 8
    $region17: #{down2_forward.1} parent=1 // pred_fallthru
      _
    // Predicated region
    $region18: #{down2_forward.1} parent=1 // pred_check
      _
    $region19: #{down2_forward.1} parent=1 // pred_check_branch
      %373 = sbr.rel (0) target = $region21
    $region20: #{down2_forward.1} parent=1 // pred_region
      %374 = dma.done [#allocation3], 2048
    $region21: #{down2_forward.1} parent=1 // pred_fallthru
      _
    %375 = vsyncpa [#allocation3], 1

</llo_original>
